<compile_context>
chip_gen: v5e
topology: v5e:2x2
jax: 0.10.0
libtpu: 0.0.40
codegen_flags: <defaults>
</compile_context>

<pallas_src>
import numpy as np
import jax
import jax.numpy as jnp
from jax import lax
from jax.experimental import pallas as pl
from jax.experimental.pallas import tpu as pltpu

# bf16 MXU operands (f32 accumulate) — recommended on v6e/v7x if ~1e-2
# agreement with the f32 reference is acceptable.
MXU_BF16 = False


def _fused_convnet_kernel(x_ref, w_ref, b_ref, o_ref, buf):
    """All 2*num_blocks conv3x3 + bias + ReLU layers for one batch element.

    Lane-dense block-Toeplitz formulation: one activation row is a (W*C,)
    vector (lane dim = 128 here); one layer = 3 matmuls (H, W*C) @ (W*C, W*C),
    one per kernel row kh.  The kw shift and the zero padding along W live in
    the Toeplitz weight matrix; the zero padding along H is the 1-row halo of
    the ping-pong scratch.

    x_ref : (1, H, WC)       lane-dense input block (VMEM)
    w_ref : (L, 3, WC, WC)   stacked block-Toeplitz weights (resident)
    b_ref : (L, 1, WC)       stacked biases, tiled across W (resident)
    o_ref : (1, H, WC)       lane-dense output block
    buf   : (2, H+2, WC)     ping-pong activation scratch with 1-row halo
    """
    _, H, WC = x_ref.shape
    L = w_ref.shape[0]
    cd = jnp.bfloat16 if MXU_BF16 else jnp.float32

    # Only the halo rows must be zero — the interior is fully rewritten each
    # layer (ReLU(0*W + 0) == 0 keeps them zero for the whole chain).
    zrow = jnp.zeros((2, 1, WC), jnp.float32)
    buf[0:2, 0:1, :] = zrow
    buf[0:2, H + 1:H + 2, :] = zrow
    # In-kernel H padding: input lands in rows 1..H of slot 0.
    buf[0:1, 1:H + 1, :] = x_ref[...].astype(jnp.float32)

    def conv_layer(l, src_slot, dst_slot):
        # Accumulator initialised with the broadcast bias; 3 MXU matmuls (one
        # per kernel row) with f32 accumulation, then ReLU on the VPU.
        acc = jnp.broadcast_to(b_ref[l], (H, WC)).astype(jnp.float32)
        for kh in range(3):                              # static: 3 matmuls/layer
            rows = buf[src_slot, kh:kh + H, :]           # (H, WC) shifted window
            acc = acc + jnp.dot(rows.astype(cd),
                                w_ref[l, kh].astype(cd),
                                preferred_element_type=jnp.float32)
        buf[dst_slot, 1:H + 1, :] = jnp.maximum(acc, 0.0)

    # One ConvBlock per iteration (two layers, static ping-pong slots 0->1->0)
    # so live ranges stay bounded instead of a 20-layer static unroll.
    def block_body(i, carry):
        conv_layer(2 * i, 0, 1)        # conv1: c1 -> c2
        conv_layer(2 * i + 1, 1, 0)    # conv2: c2 -> c1
        return carry

    lax.fori_loop(0, L // 2, block_body, 0)

    # Lane-dense (last dim = WC = 128) full-width store of the final result,
    # which lives in slot 0 since L is even.
    o_ref[...] = buf[0:1, 1:H + 1, :].astype(o_ref.dtype)


@jax.jit
def convnet_forward_nchw(x_nchw, w_stack, b_stack):
    """Full ConvNet forward. x_nchw: (N, C1, H, W) -> (N, C1, H, W)."""
    N, C1, H, W = x_nchw.shape
    L = w_stack.shape[0]
    WC = w_stack.shape[-1]
    C = WC // W

    x = jnp.transpose(x_nchw, (0, 2, 3, 1))                   # NCHW -> NHWC
    x = jnp.pad(x, ((0, 0), (0, 0), (0, 0), (0, C - C1)))     # one-time channel pad
    x = x.reshape(N, H, WC)                                    # lane-dense rows

    y = pl.pallas_call(
        _fused_convnet_kernel,
        out_shape=jax.ShapeDtypeStruct((N, H, WC), jnp.float32),
        grid=(N,),
        in_specs=[
            pl.BlockSpec((1, H, WC), lambda b: (b, 0, 0)),           # per-batch block
            pl.BlockSpec((L, 3, WC, WC), lambda b: (0, 0, 0, 0)),    # all weights, resident
            pl.BlockSpec((L, 1, WC), lambda b: (0, 0, 0)),           # all biases, resident
        ],
        out_specs=pl.BlockSpec((1, H, WC), lambda b: (b, 0, 0)),
        scratch_shapes=[pltpu.VMEM((2, H + 2, WC), jnp.float32)],    # ping-pong + halo
        compiler_params=pltpu.CompilerParams(
            dimension_semantics=("parallel",),     # 2 TCs on v7x split the batch
            vmem_limit_bytes=32 * 1024 * 1024),
    )(x, w_stack, b_stack)

    y = y.reshape(N, H, W, C)[..., :C1]                        # drop channel padding
    return jnp.transpose(y, (0, 3, 1, 2))                      # NHWC -> NCHW


def init_convnet_params(key, c1, c2, num_blocks=10):
    """Deterministic PyTorch-default-style init (U(-1/sqrt(fan_in), +))."""
    params = []
    for _ in range(num_blocks):
        key, k1, k2, k3, k4 = jax.random.split(key, 5)
        fan1 = c1 * 9
        fan2 = c2 * 9
        bnd1 = 1.0 / jnp.sqrt(fan1)
        bnd2 = 1.0 / jnp.sqrt(fan2)
        w1 = jax.random.uniform(k1, (3, 3, c1, c2), jnp.float32, -bnd1, bnd1)
        b1 = jax.random.uniform(k2, (c2,), jnp.float32, -bnd1, bnd1)
        w2 = jax.random.uniform(k3, (3, 3, c2, c1), jnp.float32, -bnd2, bnd2)
        b2 = jax.random.uniform(k4, (c1,), jnp.float32, -bnd2, bnd2)
        params.append((w1, b1, w2, b2))
    return params


def pack_params(params, width):
    """One-time (model-load-time) packing into lane-dense block-Toeplitz form.

    Returns:
      w_stack: (L, 3, W*C, W*C)  L = 2*num_blocks, C = max(c1, c2).
               w_stack[l, kh, w_in*C + ci, w_out*C + co] =
                   W_l[kh, w_in - w_out + 1, ci, co]   (zero if |w_in-w_out|>1)
      b_stack: (L, 1, W*C)       bias tiled across W.
    Padded channel rows/cols and padded bias entries are zero, so padded
    activation channels stay exactly zero through the whole network.
    """
    c1 = params[0][0].shape[2]
    c2 = params[0][0].shape[3]
    C = max(c1, c2)
    WC = width * C
    w_list, b_list = [], []
    for (w1, b1, w2, b2) in params:
        for (w, b, cin, cout) in ((w1, b1, c1, c2), (w2, b2, c2, c1)):
            wp = np.zeros((3, 3, C, C), np.float32)
            wp[:, :, :cin, :cout] = np.asarray(w)
            T = np.zeros((3, WC, WC), np.float32)
            for kh in range(3):
                for wout in range(width):
                    for kw in range(3):
                        win = wout + kw - 1
                        if 0 <= win < width:
                            T[kh, win * C:(win + 1) * C,
                              wout * C:(wout + 1) * C] = wp[kh, kw]
            w_list.append(T)
            bp = np.zeros((C,), np.float32)
            bp[:cout] = np.asarray(b)
            b_list.append(np.tile(bp, width))
    w_stack = jnp.asarray(np.stack(w_list))                     # (L, 3, WC, WC)
    b_stack = jnp.asarray(np.stack(b_list)[:, None, :])         # (L, 1, WC)
    return w_stack, b_stack


def _reference_forward_nchw(x_nchw, params):
    """Pure-JAX reference (lax.conv) for correctness checking."""
    x = jnp.transpose(x_nchw, (0, 2, 3, 1))
    dn = ('NHWC', 'HWIO', 'NHWC')
    for (w1, b1, w2, b2) in params:
        x = jax.lax.conv_general_dilated(x, w1, (1, 1), 'SAME',
                                         dimension_numbers=dn) + b1
        x = jnp.maximum(x, 0.0)
        x = jax.lax.conv_general_dilated(x, w2, (1, 1), 'SAME',
                                         dimension_numbers=dn) + b2
        x = jnp.maximum(x, 0.0)
    return jnp.transpose(x, (0, 3, 1, 2))


if __name__ == "__main__":
    key = jax.random.PRNGKey(0)
    k_x, k_p = jax.random.split(key)

    N, C1, C2, H, W = 2, 4, 8, 16, 16
    NUM_BLOCKS = 10

    x = jax.random.normal(k_x, (N, C1, H, W), jnp.float32)
    params = init_convnet_params(k_p, C1, C2, NUM_BLOCKS)

    # One-time weight-layout packing (model-load time).
    w_stack, b_stack = pack_params(params, W)

    out = jax.block_until_ready(convnet_forward_nchw(x, w_stack, b_stack))

    # Sanity check vs pure-JAX conv reference.
    ref = jax.block_until_ready(_reference_forward_nchw(x, params))
    assert out.shape == (N, C1, H, W)
    tol = 2e-2 if MXU_BF16 else 2e-4
    assert jnp.allclose(out, ref, atol=tol, rtol=tol), \
        float(jnp.max(jnp.abs(out - ref)))

    print("KERNEL_OK")
</pallas_src>

<mosaic_0001>
module attributes {stable_mosaic.version = 11 : i64} {
  func.func @_fused_convnet_kernel(%arg0: i32, %arg1: memref<1x16x128xf32, #tpu.memory_space<vmem>>, %arg2: memref<20x3x128x128xf32, #tpu.memory_space<vmem>>, %arg3: memref<20x1x128xf32, #tpu.memory_space<vmem>>, %arg4: memref<1x16x128xf32, #tpu.memory_space<vmem>>, %arg5: memref<2x18x128xf32, #tpu.memory_space<vmem>>) attributes {dimension_semantics = [#tpu.dimension_semantics<parallel>], iteration_bounds = array<i64: 2>, scalar_prefetch = 0 : i64, scratch_operands = 1 : i64, tpu.core_type = #tpu.core_type<tc>, window_params = [{transform_indices = @transform_0, window_bounds = array<i64: 1, 16, 128>}, {pipeline_mode = #tpu.pipeline_mode<synchronous>, transform_indices = @transform_1, window_bounds = array<i64: 20, 3, 128, 128>}, {pipeline_mode = #tpu.pipeline_mode<synchronous>, transform_indices = @transform_2, window_bounds = array<i64: 20, 1, 128>}, {transform_indices = @transform_3, window_bounds = array<i64: 1, 16, 128>}]} {
    %cst = arith.constant 0.000000e+00 : f32
    %0 = vector.broadcast %cst : f32 to vector<2x1x128xf32>
    %c0 = arith.constant 0 : index
    %c0_0 = arith.constant 0 : index
    %c0_1 = arith.constant 0 : index
    %1 = vector.load %arg5[%c0, %c0_0, %c0_1] : memref<2x18x128xf32, #tpu.memory_space<vmem>>, vector<2x1x128xf32>
    tpu.vector_store %arg5[%c0, %c0_0, %c0_1], %0 {strides = array<i32>} : memref<2x18x128xf32, #tpu.memory_space<vmem>>, vector<2x1x128xf32>,
    %c0_2 = arith.constant 0 : index
    %c17 = arith.constant 17 : index
    %c0_3 = arith.constant 0 : index
    %2 = vector.load %arg5[%c0_2, %c17, %c0_3] : memref<2x18x128xf32, #tpu.memory_space<vmem>>, vector<2x1x128xf32>
    tpu.vector_store %arg5[%c0_2, %c17, %c0_3], %0 {strides = array<i32>} : memref<2x18x128xf32, #tpu.memory_space<vmem>>, vector<2x1x128xf32>,
    %c0_4 = arith.constant 0 : index
    %c0_5 = arith.constant 0 : index
    %c0_6 = arith.constant 0 : index
    %3 = vector.load %arg1[%c0_4, %c0_5, %c0_6] : memref<1x16x128xf32, #tpu.memory_space<vmem>>, vector<1x16x128xf32>
    %c0_7 = arith.constant 0 : index
    %c1 = arith.constant 1 : index
    %c0_8 = arith.constant 0 : index
    %4 = vector.load %arg5[%c0_7, %c1, %c0_8] : memref<2x18x128xf32, #tpu.memory_space<vmem>>, vector<1x16x128xf32>
    tpu.vector_store %arg5[%c0_7, %c1, %c0_8], %3 {strides = array<i32>} : memref<2x18x128xf32, #tpu.memory_space<vmem>>, vector<1x16x128xf32>,
    %c0_i32 = arith.constant 0 : i32
    %c10_i32 = arith.constant 10 : i32
    %5 = arith.addi %c0_i32, %c10_i32 : i32
    %c1_i32 = arith.constant 1 : i32
    scf.for %arg6 = %c0_i32 to %5 step %c1_i32  : i32 {
      %c2_i32 = arith.constant 2 : i32
      %8 = arith.muli %c2_i32, %arg6 : i32
      %9 = arith.index_cast %8 : i32 to index
      %c0_16 = arith.constant 0 : index
      %c0_17 = arith.constant 0 : index
      %10 = vector.load %arg3[%9, %c0_16, %c0_17] : memref<20x1x128xf32, #tpu.memory_space<vmem>>, vector<1x1x128xf32>
      %11 = vector.shape_cast %10 : vector<1x1x128xf32> to vector<1x128xf32>
      %12 = vector.shape_cast %11 : vector<1x128xf32> to vector<1x128xf32>
      %13 = vector.broadcast %12 : vector<1x128xf32> to vector<16x128xf32>
      %c0_18 = arith.constant 0 : index
      %c0_19 = arith.constant 0 : index
      %c0_20 = arith.constant 0 : index
      %14 = vector.load %arg5[%c0_18, %c0_19, %c0_20] : memref<2x18x128xf32, #tpu.memory_space<vmem>>, vector<1x16x128xf32>
      %15 = vector.shape_cast %14 : vector<1x16x128xf32> to vector<16x128xf32>
      %16 = arith.index_cast %8 : i32 to index
      %c0_21 = arith.constant 0 : index
      %c0_22 = arith.constant 0 : index
      %c0_23 = arith.constant 0 : index
      %17 = vector.load %arg2[%16, %c0_21, %c0_22, %c0_23] : memref<20x3x128x128xf32, #tpu.memory_space<vmem>>, vector<1x1x128x128xf32>
      %18 = vector.shape_cast %17 : vector<1x1x128x128xf32> to vector<128x128xf32>
      %cst_24 = arith.constant dense<0.000000e+00> : vector<16x128xf32>
      %19 = tpu.matmul %15, %18, %cst_24 {dimension_numbers = #tpu.dot_dimension_numbers<[1], [0], [0], [1], [0, 0, 1, 1], [], []>} : vector<16x128xf32>, vector<128x128xf32>, vector<16x128xf32> -> vector<16x128xf32>
      %20 = arith.addf %13, %19 : vector<16x128xf32>
      %c0_25 = arith.constant 0 : index
      %c1_26 = arith.constant 1 : index
      %c0_27 = arith.constant 0 : index
      %21 = vector.load %arg5[%c0_25, %c1_26, %c0_27] : memref<2x18x128xf32, #tpu.memory_space<vmem>>, vector<1x16x128xf32>
      %22 = vector.shape_cast %21 : vector<1x16x128xf32> to vector<16x128xf32>
      %23 = arith.index_cast %8 : i32 to index
      %c1_28 = arith.constant 1 : index
      %c0_29 = arith.constant 0 : index
      %c0_30 = arith.constant 0 : index
      %24 = vector.load %arg2[%23, %c1_28, %c0_29, %c0_30] : memref<20x3x128x128xf32, #tpu.memory_space<vmem>>, vector<1x1x128x128xf32>
      %25 = vector.shape_cast %24 : vector<1x1x128x128xf32> to vector<128x128xf32>
      %cst_31 = arith.constant dense<0.000000e+00> : vector<16x128xf32>
      %26 = tpu.matmul %22, %25, %cst_31 {dimension_numbers = #tpu.dot_dimension_numbers<[1], [0], [0], [1], [0, 0, 1, 1], [], []>} : vector<16x128xf32>, vector<128x128xf32>, vector<16x128xf32> -> vector<16x128xf32>
      %27 = arith.addf %20, %26 : vector<16x128xf32>
      %c0_32 = arith.constant 0 : index
      %c2 = arith.constant 2 : index
      %c0_33 = arith.constant 0 : index
      %28 = vector.load %arg5[%c0_32, %c2, %c0_33] : memref<2x18x128xf32, #tpu.memory_space<vmem>>, vector<1x16x128xf32>
      %29 = vector.shape_cast %28 : vector<1x16x128xf32> to vector<16x128xf32>
      %30 = arith.index_cast %8 : i32 to index
      %c2_34 = arith.constant 2 : index
      %c0_35 = arith.constant 0 : index
      %c0_36 = arith.constant 0 : index
      %31 = vector.load %arg2[%30, %c2_34, %c0_35, %c0_36] : memref<20x3x128x128xf32, #tpu.memory_space<vmem>>, vector<1x1x128x128xf32>
      %32 = vector.shape_cast %31 : vector<1x1x128x128xf32> to vector<128x128xf32>
      %cst_37 = arith.constant dense<0.000000e+00> : vector<16x128xf32>
      %33 = tpu.matmul %29, %32, %cst_37 {dimension_numbers = #tpu.dot_dimension_numbers<[1], [0], [0], [1], [0, 0, 1, 1], [], []>} : vector<16x128xf32>, vector<128x128xf32>, vector<16x128xf32> -> vector<16x128xf32>
      %34 = arith.addf %27, %33 : vector<16x128xf32>
      %cst_38 = arith.constant 0.000000e+00 : f32
      %35 = vector.broadcast %cst_38 : f32 to vector<16x128xf32>
      %36 = arith.maximumf %34, %35 : vector<16x128xf32>
      %c1_39 = arith.constant 1 : index
      %c1_40 = arith.constant 1 : index
      %c0_41 = arith.constant 0 : index
      %37 = vector.load %arg5[%c1_39, %c1_40, %c0_41] : memref<2x18x128xf32, #tpu.memory_space<vmem>>, vector<1x16x128xf32>
      %38 = vector.shape_cast %37 : vector<1x16x128xf32> to vector<16x128xf32>
      %39 = vector.shape_cast %36 : vector<16x128xf32> to vector<1x16x128xf32>
      tpu.vector_store %arg5[%c1_39, %c1_40, %c0_41], %39 {strides = array<i32>} : memref<2x18x128xf32, #tpu.memory_space<vmem>>, vector<1x16x128xf32>,
      %c2_i32_42 = arith.constant 2 : i32
      %40 = arith.muli %c2_i32_42, %arg6 : i32
      %c1_i32_43 = arith.constant 1 : i32
      %41 = arith.addi %40, %c1_i32_43 : i32
      %42 = arith.index_cast %41 : i32 to index
      %c0_44 = arith.constant 0 : index
      %c0_45 = arith.constant 0 : index
      %43 = vector.load %arg3[%42, %c0_44, %c0_45] : memref<20x1x128xf32, #tpu.memory_space<vmem>>, vector<1x1x128xf32>
      %44 = vector.shape_cast %43 : vector<1x1x128xf32> to vector<1x128xf32>
      %45 = vector.shape_cast %44 : vector<1x128xf32> to vector<1x128xf32>
      %46 = vector.broadcast %45 : vector<1x128xf32> to vector<16x128xf32>
      %c1_46 = arith.constant 1 : index
      %c0_47 = arith.constant 0 : index
      %c0_48 = arith.constant 0 : index
      %47 = vector.load %arg5[%c1_46, %c0_47, %c0_48] : memref<2x18x128xf32, #tpu.memory_space<vmem>>, vector<1x16x128xf32>
      %48 = vector.shape_cast %47 : vector<1x16x128xf32> to vector<16x128xf32>
      %49 = arith.index_cast %41 : i32 to index
      %c0_49 = arith.constant 0 : index
      %c0_50 = arith.constant 0 : index
      %c0_51 = arith.constant 0 : index
      %50 = vector.load %arg2[%49, %c0_49, %c0_50, %c0_51] : memref<20x3x128x128xf32, #tpu.memory_space<vmem>>, vector<1x1x128x128xf32>
      %51 = vector.shape_cast %50 : vector<1x1x128x128xf32> to vector<128x128xf32>
      %cst_52 = arith.constant dense<0.000000e+00> : vector<16x128xf32>
      %52 = tpu.matmul %48, %51, %cst_52 {dimension_numbers = #tpu.dot_dimension_numbers<[1], [0], [0], [1], [0, 0, 1, 1], [], []>} : vector<16x128xf32>, vector<128x128xf32>, vector<16x128xf32> -> vector<16x128xf32>
      %53 = arith.addf %46, %52 : vector<16x128xf32>
      %c1_53 = arith.constant 1 : index
      %c1_54 = arith.constant 1 : index
      %c0_55 = arith.constant 0 : index
      %54 = vector.load %arg5[%c1_53, %c1_54, %c0_55] : memref<2x18x128xf32, #tpu.memory_space<vmem>>, vector<1x16x128xf32>
      %55 = vector.shape_cast %54 : vector<1x16x128xf32> to vector<16x128xf32>
      %56 = arith.index_cast %41 : i32 to index
      %c1_56 = arith.constant 1 : index
      %c0_57 = arith.constant 0 : index
      %c0_58 = arith.constant 0 : index
      %57 = vector.load %arg2[%56, %c1_56, %c0_57, %c0_58] : memref<20x3x128x128xf32, #tpu.memory_space<vmem>>, vector<1x1x128x128xf32>
      %58 = vector.shape_cast %57 : vector<1x1x128x128xf32> to vector<128x128xf32>
      %cst_59 = arith.constant dense<0.000000e+00> : vector<16x128xf32>
      %59 = tpu.matmul %55, %58, %cst_59 {dimension_numbers = #tpu.dot_dimension_numbers<[1], [0], [0], [1], [0, 0, 1, 1], [], []>} : vector<16x128xf32>, vector<128x128xf32>, vector<16x128xf32> -> vector<16x128xf32>
      %60 = arith.addf %53, %59 : vector<16x128xf32>
      %c1_60 = arith.constant 1 : index
      %c2_61 = arith.constant 2 : index
      %c0_62 = arith.constant 0 : index
      %61 = vector.load %arg5[%c1_60, %c2_61, %c0_62] : memref<2x18x128xf32, #tpu.memory_space<vmem>>, vector<1x16x128xf32>
      %62 = vector.shape_cast %61 : vector<1x16x128xf32> to vector<16x128xf32>
      %63 = arith.index_cast %41 : i32 to index
      %c2_63 = arith.constant 2 : index
      %c0_64 = arith.constant 0 : index
      %c0_65 = arith.constant 0 : index
      %64 = vector.load %arg2[%63, %c2_63, %c0_64, %c0_65] : memref<20x3x128x128xf32, #tpu.memory_space<vmem>>, vector<1x1x128x128xf32>
      %65 = vector.shape_cast %64 : vector<1x1x128x128xf32> to vector<128x128xf32>
      %cst_66 = arith.constant dense<0.000000e+00> : vector<16x128xf32>
      %66 = tpu.matmul %62, %65, %cst_66 {dimension_numbers = #tpu.dot_dimension_numbers<[1], [0], [0], [1], [0, 0, 1, 1], [], []>} : vector<16x128xf32>, vector<128x128xf32>, vector<16x128xf32> -> vector<16x128xf32>
      %67 = arith.addf %60, %66 : vector<16x128xf32>
      %cst_67 = arith.constant 0.000000e+00 : f32
      %68 = vector.broadcast %cst_67 : f32 to vector<16x128xf32>
      %69 = arith.maximumf %67, %68 : vector<16x128xf32>
      %c0_68 = arith.constant 0 : index
      %c1_69 = arith.constant 1 : index
      %c0_70 = arith.constant 0 : index
      %70 = vector.load %arg5[%c0_68, %c1_69, %c0_70] : memref<2x18x128xf32, #tpu.memory_space<vmem>>, vector<1x16x128xf32>
      %71 = vector.shape_cast %70 : vector<1x16x128xf32> to vector<16x128xf32>
      %72 = vector.shape_cast %69 : vector<16x128xf32> to vector<1x16x128xf32>
      tpu.vector_store %arg5[%c0_68, %c1_69, %c0_70], %72 {strides = array<i32>} : memref<2x18x128xf32, #tpu.memory_space<vmem>>, vector<1x16x128xf32>,
    }
    %c10_i32_9 = arith.constant 10 : i32
    %c0_10 = arith.constant 0 : index
    %c1_11 = arith.constant 1 : index
    %c0_12 = arith.constant 0 : index
    %6 = vector.load %arg5[%c0_10, %c1_11, %c0_12] : memref<2x18x128xf32, #tpu.memory_space<vmem>>, vector<1x16x128xf32>
    %c0_13 = arith.constant 0 : index
    %c0_14 = arith.constant 0 : index
    %c0_15 = arith.constant 0 : index
    %7 = vector.load %arg4[%c0_13, %c0_14, %c0_15] : memref<1x16x128xf32, #tpu.memory_space<vmem>>, vector<1x16x128xf32>
    tpu.vector_store %arg4[%c0_13, %c0_14, %c0_15], %6 {strides = array<i32>} : memref<1x16x128xf32, #tpu.memory_space<vmem>>, vector<1x16x128xf32>,
    return
  }
  func.func @transform_0(%arg0: i32) -> (i32, i32, i32) {
    %c0_i32 = arith.constant 0 : i32
    %c0_i32_0 = arith.constant 0 : i32
    %c0_i32_1 = arith.constant 0 : i32
    return %arg0, %c0_i32, %c0_i32_0 : i32, i32, i32
  }
  func.func @transform_1(%arg0: i32) -> (i32, i32, i32, i32) {
    %c0_i32 = arith.constant 0 : i32
    %c0_i32_0 = arith.constant 0 : i32
    %c0_i32_1 = arith.constant 0 : i32
    %c0_i32_2 = arith.constant 0 : i32
    %c0_i32_3 = arith.constant 0 : i32
    return %c0_i32, %c0_i32_0, %c0_i32_1, %c0_i32_2 : i32, i32, i32, i32
  }
  func.func @transform_2(%arg0: i32) -> (i32, i32, i32) {
    %c0_i32 = arith.constant 0 : i32
    %c0_i32_0 = arith.constant 0 : i32
    %c0_i32_1 = arith.constant 0 : i32
    %c0_i32_2 = arith.constant 0 : i32
    return %c0_i32, %c0_i32_0, %c0_i32_1 : i32, i32, i32
  }
  func.func @transform_3(%arg0: i32) -> (i32, i32, i32) {
    %c0_i32 = arith.constant 0 : i32
    %c0_i32_0 = arith.constant 0 : i32
    %c0_i32_1 = arith.constant 0 : i32
    return %arg0, %c0_i32, %c0_i32_0 : i32, i32, i32
  }
}

</mosaic_0001>

<llo_original>
// kernel: convnet_forward_nchw.1
$region0: #{convnet_forward_nchw.1}
  #allocation0 [shape = 'u32[]', space=smem, size = 0x4, offset = 0x4, fixed_abs, tag = 'smem constant byte address 0x4 - core index']
  #allocation1 [shape = 'u32[72,128]{1,0:T(1,128)}', space=vmem, size = 0x9000, scoped, tag = 'internal scratch']
  #allocation2 [shape = 'f32[2,18,128]{2,1,0:T(8,128)}', space=vmem, size = 0x6000, scoped, tag = 'scratch operand']
  %s0 = inlined_call_operand.vmem [shape: f32[2,16,128], index: 0, kind: input, shape index: {}]
  %s1 = inlined_call_operand.hbm [shape: f32[20,3,128,128], index: 1, kind: input, shape index: {}]
  %s2 = inlined_call_operand.hbm [shape: f32[20,1,128], index: 2, kind: input, shape index: {}]
  %s3 = inlined_call_operand.vmem [shape: f32[2,16,128], index: 3, kind: output, shape index: {}]
  %s4 = sld [smem:[#allocation0]]
  $region60: #{convnet_forward_nchw.1} parent=0
    _
  %s6 = ssub.s32 1, %s4
  %s7 = scalar_select 0, %s6, %s4
  $region1: #{convnet_forward_nchw.1} parent=0
    #allocation3 [shape = 'u8[3932160]{0}', space=vmem, size = 0x3c0000, scoped, tag = 'input window, operand 1, single buffered']
    #allocation4 [shape = 's32[2]{0}', space=sflag, size = 0x8, scoped, tag = 'scoped memory for convnet_forward_nchw.1']
    #allocation5 [shape = 'u8[10240]{0}', space=vmem, size = 0x2800, scoped, tag = 'input window, operand 2, single buffered']
    #allocation6 [shape = 's32[1]{0}', space=sflag, size = 0x4, scoped, tag = 'scoped memory for convnet_forward_nchw.1']
    %8 = vsyncpa [#allocation4], 0
    %9 = vsyncpa [#allocation6], 0
    loop: start=0, step=1, limit=4
    $region2: #{convnet_forward_nchw.1} parent=1 // loop_pre_header
      _
    $region3: #{convnet_forward_nchw.1} parent=1 // loop_header
      %s11 = sphi 0, %s15
      %p12 = scmp.ge.s32.totalorder %s11, 4
      %s21 = sphi 0, %s23
      %s24 = sphi 0, %s21
      %s25 = sphi 0, %s24
      %s41 = sphi 0, %s25
      %s45 = sphi 0, %s45
      %s47 = sphi 0, %s45
      %s48 = sphi 0, %s47
      %s62 = sphi 0, %s48
      %s66 = sphi 0, %s66
      %s68 = sphi 0, %s66
      %s69 = sphi 0, %s68
      %s83 = sphi 0, %s69
      %s89 = sphi 0, %s91
      %s92 = sphi 0, %s89
      %s93 = sphi 0, %s92
      %s109 = sphi 0, %s93
    $region4: #{convnet_forward_nchw.1} parent=1 // loop_header_branch
      %14 = sbr.rel (%p12) target = $region8
    $region5: #{convnet_forward_nchw.1} parent=1 // loop_body
      %s16 = ssub.s32 %s11, 1
      %s17 = ssub.s32 %s11, 2
      %s18 = sadd.s32 %s11, 1
      %s19 = ssub.s32 %s11, %s18
      %p20 = scmp.eq.s32.totalorder %s19, 0
      %s22 = sadd.s32 %s21, 1
      %s23 = scalar_select %p20, %s21, %s22
      %p26 = pneg %p20
      %p27 = scmp.eq.s32.totalorder %s11, 1
      %p28 = por %p26, %p27
      %p29 = scmp.ne.s32.totalorder %s21, %s24
      %p30 = scmp.eq.s32.totalorder %s11, 0
      %p31 = por %p29, %p30
      %p32 = scmp.ne.s32.totalorder %s21, %s24
      %p33 = scmp.eq.s32.totalorder %s16, 1
      %p34 = por %p32, %p33
      %p35 = scmp.ne.s32.totalorder %s24, %s25
      %p36 = scmp.eq.s32.totalorder %s16, 0
      %p37 = por %p35, %p36
      %p38 = scmp.ne.s32.totalorder %s24, %s25
      %p39 = scmp.eq.s32.totalorder %s17, 1
      %p40 = por %p38, %p39
      %p42 = scmp.ne.s32.totalorder %s25, %s41
      %p43 = scmp.eq.s32.totalorder %s17, 0
      %p44 = por %p42, %p43
      %s46 = sadd.s32 %s45, 1
      %p49 = scmp.eq.s32.totalorder %s11, 1
      %p50 = scmp.ne.s32.totalorder %s45, %s47
      %p51 = scmp.eq.s32.totalorder %s11, 0
      %p52 = por %p50, %p51
      %p53 = scmp.ne.s32.totalorder %s45, %s47
      %p54 = scmp.eq.s32.totalorder %s16, 1
      %p55 = por %p53, %p54
      %p56 = scmp.ne.s32.totalorder %s47, %s48
      %p57 = scmp.eq.s32.totalorder %s16, 0
      %p58 = por %p56, %p57
      %p59 = scmp.ne.s32.totalorder %s47, %s48
      %p60 = scmp.eq.s32.totalorder %s17, 1
      %p61 = por %p59, %p60
      %p63 = scmp.ne.s32.totalorder %s48, %s62
      %p64 = scmp.eq.s32.totalorder %s17, 0
      %p65 = por %p63, %p64
      %s67 = sadd.s32 %s66, 1
      %p70 = scmp.eq.s32.totalorder %s11, 1
      %p71 = scmp.ne.s32.totalorder %s66, %s68
      %p72 = scmp.eq.s32.totalorder %s11, 0
      %p73 = por %p71, %p72
      %p74 = scmp.ne.s32.totalorder %s66, %s68
      %p75 = scmp.eq.s32.totalorder %s16, 1
      %p76 = por %p74, %p75
      %p77 = scmp.ne.s32.totalorder %s68, %s69
      %p78 = scmp.eq.s32.totalorder %s16, 0
      %p79 = por %p77, %p78
      %p80 = scmp.ne.s32.totalorder %s68, %s69
      %p81 = scmp.eq.s32.totalorder %s17, 1
      %p82 = por %p80, %p81
      %p84 = scmp.ne.s32.totalorder %s69, %s83
      %p85 = scmp.eq.s32.totalorder %s17, 0
      %p86 = por %p84, %p85
      %s87 = ssub.s32 %s11, %s18
      %p88 = scmp.eq.s32.totalorder %s87, 0
      %s90 = sadd.s32 %s89, 1
      %s91 = scalar_select %p88, %s89, %s90
      %p94 = pneg %p88
      %p95 = scmp.eq.s32.totalorder %s11, 1
      %p96 = por %p94, %p95
      %p97 = scmp.ne.s32.totalorder %s89, %s92
      %p98 = scmp.eq.s32.totalorder %s11, 0
      %p99 = por %p97, %p98
      %p100 = scmp.ne.s32.totalorder %s89, %s92
      %p101 = scmp.eq.s32.totalorder %s16, 1
      %p102 = por %p100, %p101
      %p103 = scmp.ne.s32.totalorder %s92, %s93
      %p104 = scmp.eq.s32.totalorder %s16, 0
      %p105 = por %p103, %p104
      %p106 = scmp.ne.s32.totalorder %s92, %s93
      %p107 = scmp.eq.s32.totalorder %s17, 1
      %p108 = por %p106, %p107
      %p110 = scmp.ne.s32.totalorder %s93, %s109
      %p111 = scmp.eq.s32.totalorder %s17, 0
      %p112 = por %p110, %p111
      %p113 = scmp.le.s32.totalorder 1, %s11
      %p114 = scmp.lt.s32.totalorder %s11, 3
      %p115 = pnand %p113, %p114
      %p116 = pneg %p115
      // Predicated region
      $region9: #{convnet_forward_nchw.1} parent=5 // pred_check
        _
      $region10: #{convnet_forward_nchw.1} parent=5 // pred_check_branch
        %118 = sbr.rel (%p115) target = $region12
      $region11: #{convnet_forward_nchw.1} parent=5 // pred_region
        %s119 = ssub.s32 %s11, 1
        // Predicated region
        $region13: #{convnet_forward_nchw.1} parent=11 // pred_check
          %p120 = pneg %p58
        $region14: #{convnet_forward_nchw.1} parent=11 // pred_check_branch
          %122 = sbr.rel (%p120) target = $region16
        $region15: #{convnet_forward_nchw.1} parent=11 // pred_region
          %124 = vsyncadd [#allocation4], 0
          %s125 = sshll.u32 %s1, 4
          %s126 = int_to_ptr.hbm [resolvable:$true] %s125
          %s127 = sshll.u32 [#allocation3], 4
          %s128 = int_to_ptr.vmem [resolvable:$true] %s127
          %133 = dma.hbm_to_vmem [thread:$0]  %s126, 122880, %s128, [#allocation4], 128, 128, 8
        $region16: #{convnet_forward_nchw.1} parent=11 // pred_fallthru
          _
        // Predicated region
        $region17: #{convnet_forward_nchw.1} parent=11 // pred_check
          %p134 = pneg %p79
        $region18: #{convnet_forward_nchw.1} parent=11 // pred_check_branch
          %136 = sbr.rel (%p134) target = $region20
        $region19: #{convnet_forward_nchw.1} parent=11 // pred_region
          %138 = vsyncadd [#allocation6], 0
          %s139 = sshll.u32 %s2, 4
          %s140 = int_to_ptr.hbm [resolvable:$true] %s139
          %s141 = sshll.u32 [#allocation5], 4
          %s142 = int_to_ptr.vmem [resolvable:$true] %s141
          %147 = dma.hbm_to_vmem [thread:$0]  %s140, 320, %s142, [#allocation6], 16, 16, 1
        $region20: #{convnet_forward_nchw.1} parent=11 // pred_fallthru
          _
      $region12: #{convnet_forward_nchw.1} parent=5 // pred_fallthru
        _
      %p148 = scmp.lt.s32.totalorder %s11, 2
      // Predicated region
      $region21: #{convnet_forward_nchw.1} parent=5 // pred_check
        %p149 = pneg %p148
      $region22: #{convnet_forward_nchw.1} parent=5 // pred_check_branch
        %151 = sbr.rel (%p149) target = $region24
      $region23: #{convnet_forward_nchw.1} parent=5 // pred_region
        // Predicated region
        $region25: #{convnet_forward_nchw.1} parent=23 // pred_check
          %p152 = pneg %p31
        $region26: #{convnet_forward_nchw.1} parent=23 // pred_check_branch
          %154 = sbr.rel (%p152) target = $region28
        $region27: #{convnet_forward_nchw.1} parent=23 // pred_region
          %p155 = scmp.lt.s32.totalorder %s11, 1
          %s156 = scalar_select %p155, %s11, 1
          %s157 = smul.addr %s156, 2
          %s158 = smul.addr %s157, 8
          %s159 = scalar_lea.vmem %s0, %s158
        $region28: #{convnet_forward_nchw.1} parent=23 // pred_fallthru
          _
      $region24: #{convnet_forward_nchw.1} parent=5 // pred_fallthru
        _
      %p160 = scmp.le.s32.totalorder 1, %s11
      %p161 = scmp.lt.s32.totalorder %s11, 3
      %p162 = pnand %p160, %p161
      %p163 = pneg %p162
      // Predicated region
      $region29: #{convnet_forward_nchw.1} parent=5 // pred_check
        _
      $region30: #{convnet_forward_nchw.1} parent=5 // pred_check_branch
        %165 = sbr.rel (%p162) target = $region32
      $region31: #{convnet_forward_nchw.1} parent=5 // pred_region
        %s166 = ssub.s32 %s11, 1
        // Predicated region
        $region33: #{convnet_forward_nchw.1} parent=31 // pred_check
          %p167 = pneg %p58
        $region34: #{convnet_forward_nchw.1} parent=31 // pred_check_branch
          %169 = sbr.rel (%p167) target = $region36
        $region35: #{convnet_forward_nchw.1} parent=31 // pred_region
          %171 = dma.done [#allocation4], 122880
        $region36: #{convnet_forward_nchw.1} parent=31 // pred_fallthru
          _
        // Predicated region
        $region37: #{convnet_forward_nchw.1} parent=31 // pred_check
          %p172 = pneg %p79
        $region38: #{convnet_forward_nchw.1} parent=31 // pred_check_branch
          %174 = sbr.rel (%p172) target = $region40
        $region39: #{convnet_forward_nchw.1} parent=31 // pred_region
          %176 = dma.done [#allocation6], 320
        $region40: #{convnet_forward_nchw.1} parent=31 // pred_fallthru
          _
        %p177 = scmp.lt.s32.totalorder %s16, 1
        %s178 = scalar_select %p177, %s16, 1
        %s179 = smul.addr %s178, 2
        %s180 = smul.addr %s179, 8
        %s181 = scalar_lea.vmem %s0, %s180
        %p182 = pneg %p37
        %p183 = pneg %p34
        %p184 = pneg %p58
        %p185 = pneg %p55
        %p186 = pneg %p79
        %p187 = pneg %p76
        %p188 = pneg %p105
        %p189 = pneg %p102
        %p190 = scmp.lt.s32.totalorder %s16, 1
        %s191 = scalar_select %p190, %s16, 1
        %s192 = smul.addr %s191, 2
        %s193 = smul.addr %s192, 8
        %s194 = scalar_lea.vmem %s3, %s193
        %p195 = scmp.lt.s32.totalorder %s16, 1
        %s196 = scalar_select %p195, %s16, 1
        %s197 = smul.addr %s196, 2
        %s198 = smul.addr %s197, 8
        %s199 = scalar_lea.vmem %s0, %s198
        %p200 = scmp.lt.s32.totalorder %s16, 1
        %s201 = scalar_select %p200, %s16, 1
        %s202 = smul.addr %s201, 2
        %s203 = smul.addr %s202, 8
        %s204 = scalar_lea.vmem %s3, %s203
        %205 = vst [vmem:[#allocation2] sm:$0x1] 0.0
        %206 = vst [vmem:[#allocation2 + $0x18] sm:$0x1] 0.0
        %207 = vst [vmem:[#allocation2 + $0x11] sm:$0x1] 0.0
        %208 = vst [vmem:[#allocation2 + $0x29] sm:$0x1] 0.0
        %v209 = vld [vmem:[%s199] sm:$0xff]
        %v210 = vld [vmem:[%s199 + $0x8] sm:$0xff]
        %211 = vst [vmem:[#allocation2 + $0x1] sm:$0xff] %v209
        %212 = vst [vmem:[#allocation2 + $0x9] sm:$0xff] %v210
        loop: start=0, step=1, limit=10
        $region41: #{convnet_forward_nchw.1} parent=31 // loop_pre_header
          _
        $region42: #{convnet_forward_nchw.1} parent=31 // loop_header
          %s214 = sphi 0, %s218
          %p215 = scmp.ge.s32.totalorder %s214, 10
        $region43: #{convnet_forward_nchw.1} parent=31 // loop_header_branch
          %217 = sbr.rel (%p215) target = $region47
        $region44: #{convnet_forward_nchw.1} parent=31 // loop_body
          %s219 = smul.u32 %s214, 2
          %s220 = scalar_lea.vmem [#allocation5], %s219
          %v221 = vld [vmem:[%s220] sm:$0x1]
          %v223 = vperm.slane %v221, 0
          %v225 = vld [vmem:[#allocation2] sm:$0xff]
          %v226 = vld [vmem:[#allocation2 + $0x8] sm:$0xff]
          %s227 = smul.u32 %s219, 384
          %s228 = scalar_lea.vmem [#allocation3], %s227
          %v229 = vld [vmem:[%s228] sm:$0xff]
          %v230 = vld [vmem:[%s228 + $0x8] sm:$0xff]
          %v231 = vld [vmem:[%s228 + $0x10] sm:$0xff]
          %v232 = vld [vmem:[%s228 + $0x18] sm:$0xff]
          %v233 = vld [vmem:[%s228 + $0x20] sm:$0xff]
          %v234 = vld [vmem:[%s228 + $0x28] sm:$0xff]
          %v235 = vld [vmem:[%s228 + $0x30] sm:$0xff]
          %v236 = vld [vmem:[%s228 + $0x38] sm:$0xff]
          %v237 = vld [vmem:[%s228 + $0x40] sm:$0xff]
          %v238 = vld [vmem:[%s228 + $0x48] sm:$0xff]
          %v239 = vld [vmem:[%s228 + $0x50] sm:$0xff]
          %v240 = vld [vmem:[%s228 + $0x58] sm:$0xff]
          %v241 = vld [vmem:[%s228 + $0x60] sm:$0xff]
          %v242 = vld [vmem:[%s228 + $0x68] sm:$0xff]
          %v243 = vld [vmem:[%s228 + $0x70] sm:$0xff]
          %v244 = vld [vmem:[%s228 + $0x78] sm:$0xff]
          %245 = vmatpush.msra.mxu0 %v244
          %246 = vmatpush.msra.mxu0 %v243
          %247 = vmatpush.msra.mxu0 %v242
          %248 = vmatpush.msra.mxu0 %v241
          %249 = vmatpush.msra.mxu0 %v240
          %250 = vmatpush.msra.mxu0 %v239
          %251 = vmatpush.msra.mxu0 %v238
          %252 = vmatpush.msra.mxu0 %v237
          %253 = vmatpush.msra.mxu0 %v236
          %254 = vmatpush.msra.mxu0 %v235
          %255 = vmatpush.msra.mxu0 %v234
          %256 = vmatpush.msra.mxu0 %v233
          %257 = vmatpush.msra.mxu0 %v232
          %258 = vmatpush.msra.mxu0 %v231
          %259 = vmatpush.msra.mxu0 %v230
          %260 = vmatpush.msra.mxu0 %v229
          %261 = vmatmul.f32.gmra.mxu0 %v225
          %v262 = vpop.f32.mrf.mxu0
          %v263 = vadd.f32 0.0, %v262
          %264 = vmatmul.f32.gmra.mxu0 %v226
          %v265 = vpop.f32.mrf.mxu0
          %v266 = vadd.f32 0.0, %v265
          %267 = vdwg.mxu0
          %v268 = vadd.f32 %v223, %v263
          %v269 = vadd.f32 %v223, %v266
          %v270 = vld [vmem:[#allocation2 + $0x1] sm:$0xff]
          %v271 = vld [vmem:[#allocation2 + $0x9] sm:$0xff]
          %s272 = sadd.s32 128, %s227
          %s273 = scalar_lea.vmem [#allocation3], %s272
          %v274 = vld [vmem:[%s273] sm:$0xff]
          %v275 = vld [vmem:[%s273 + $0x8] sm:$0xff]
          %v276 = vld [vmem:[%s273 + $0x10] sm:$0xff]
          %v277 = vld [vmem:[%s273 + $0x18] sm:$0xff]
          %v278 = vld [vmem:[%s273 + $0x20] sm:$0xff]
          %v279 = vld [vmem:[%s273 + $0x28] sm:$0xff]
          %v280 = vld [vmem:[%s273 + $0x30] sm:$0xff]
          %v281 = vld [vmem:[%s273 + $0x38] sm:$0xff]
          %v282 = vld [vmem:[%s273 + $0x40] sm:$0xff]
          %v283 = vld [vmem:[%s273 + $0x48] sm:$0xff]
          %v284 = vld [vmem:[%s273 + $0x50] sm:$0xff]
          %v285 = vld [vmem:[%s273 + $0x58] sm:$0xff]
          %v286 = vld [vmem:[%s273 + $0x60] sm:$0xff]
          %v287 = vld [vmem:[%s273 + $0x68] sm:$0xff]
          %v288 = vld [vmem:[%s273 + $0x70] sm:$0xff]
          %v289 = vld [vmem:[%s273 + $0x78] sm:$0xff]
          %290 = vmatpush.msra.mxu0 %v289
          %291 = vmatpush.msra.mxu0 %v288
          %292 = vmatpush.msra.mxu0 %v287
          %293 = vmatpush.msra.mxu0 %v286
          %294 = vmatpush.msra.mxu0 %v285
          %295 = vmatpush.msra.mxu0 %v284
          %296 = vmatpush.msra.mxu0 %v283
          %297 = vmatpush.msra.mxu0 %v282
          %298 = vmatpush.msra.mxu0 %v281
          %299 = vmatpush.msra.mxu0 %v280
          %300 = vmatpush.msra.mxu0 %v279
          %301 = vmatpush.msra.mxu0 %v278
          %302 = vmatpush.msra.mxu0 %v277
          %303 = vmatpush.msra.mxu0 %v276
          %304 = vmatpush.msra.mxu0 %v275
          %305 = vmatpush.msra.mxu0 %v274
          %306 = vmatmul.f32.gmra.mxu0 %v270
          %v307 = vpop.f32.mrf.mxu0
          %v308 = vadd.f32 0.0, %v307
          %309 = vmatmul.f32.gmra.mxu0 %v271
          %v310 = vpop.f32.mrf.mxu0
          %v311 = vadd.f32 0.0, %v310
          %312 = vdwg.mxu0
          %v313 = vadd.f32 %v268, %v308
          %v314 = vadd.f32 %v269, %v311
          %v315 = vld [vmem:[#allocation2 + $0x2] sm:$0xff]
          %v316 = vld [vmem:[#allocation2 + $0xa] sm:$0xff]
          %s317 = sadd.s32 256, %s227
          %s318 = scalar_lea.vmem [#allocation3], %s317
          %v319 = vld [vmem:[%s318] sm:$0xff]
          %v320 = vld [vmem:[%s318 + $0x8] sm:$0xff]
          %v321 = vld [vmem:[%s318 + $0x10] sm:$0xff]
          %v322 = vld [vmem:[%s318 + $0x18] sm:$0xff]
          %v323 = vld [vmem:[%s318 + $0x20] sm:$0xff]
          %v324 = vld [vmem:[%s318 + $0x28] sm:$0xff]
          %v325 = vld [vmem:[%s318 + $0x30] sm:$0xff]
          %v326 = vld [vmem:[%s318 + $0x38] sm:$0xff]
          %v327 = vld [vmem:[%s318 + $0x40] sm:$0xff]
          %v328 = vld [vmem:[%s318 + $0x48] sm:$0xff]
          %v329 = vld [vmem:[%s318 + $0x50] sm:$0xff]
          %v330 = vld [vmem:[%s318 + $0x58] sm:$0xff]
          %v331 = vld [vmem:[%s318 + $0x60] sm:$0xff]
          %v332 = vld [vmem:[%s318 + $0x68] sm:$0xff]
          %v333 = vld [vmem:[%s318 + $0x70] sm:$0xff]
          %v334 = vld [vmem:[%s318 + $0x78] sm:$0xff]
          %335 = vmatpush.msra.mxu0 %v334
          %336 = vmatpush.msra.mxu0 %v333
          %337 = vmatpush.msra.mxu0 %v332
          %338 = vmatpush.msra.mxu0 %v331
          %339 = vmatpush.msra.mxu0 %v330
          %340 = vmatpush.msra.mxu0 %v329
          %341 = vmatpush.msra.mxu0 %v328
          %342 = vmatpush.msra.mxu0 %v327
          %343 = vmatpush.msra.mxu0 %v326
          %344 = vmatpush.msra.mxu0 %v325
          %345 = vmatpush.msra.mxu0 %v324
          %346 = vmatpush.msra.mxu0 %v323
          %347 = vmatpush.msra.mxu0 %v322
          %348 = vmatpush.msra.mxu0 %v321
          %349 = vmatpush.msra.mxu0 %v320
          %350 = vmatpush.msra.mxu0 %v319
          %351 = vmatmul.f32.gmra.mxu0 %v315
          %v352 = vpop.f32.mrf.mxu0
          %v353 = vadd.f32 0.0, %v352
          %354 = vmatmul.f32.gmra.mxu0 %v316
          %v355 = vpop.f32.mrf.mxu0
          %v356 = vadd.f32 0.0, %v355
          %357 = vdwg.mxu0
          %v358 = vadd.f32 %v313, %v353
          %v359 = vadd.f32 %v314, %v356
          %v360 = vmax.f32 %v358, 0.0
          %v361 = vmax.f32 %v359, 0.0
          %s362 = scalar_lea.vmem [#allocation2], 24
          %363 = vst [vmem:[%s362 + $0x1] sm:$0xff] %v360
          %364 = vst [vmem:[%s362 + $0x9] sm:$0xff] %v361
          %s365 = sadd.s32 %s219, 1
          %s366 = scalar_lea.vmem [#allocation5], %s365
          %v367 = vld [vmem:[%s366] sm:$0x1]
          %v369 = vperm.slane %v367, 0
          %v371 = vld [vmem:[%s362] sm:$0xff]
          %v372 = vld [vmem:[%s362 + $0x8] sm:$0xff]
          %s373 = smul.u32 %s365, 384
          %s374 = scalar_lea.vmem [#allocation3], %s373
          %v375 = vld [vmem:[%s374] sm:$0xff]
          %v376 = vld [vmem:[%s374 + $0x8] sm:$0xff]
          %v377 = vld [vmem:[%s374 + $0x10] sm:$0xff]
          %v378 = vld [vmem:[%s374 + $0x18] sm:$0xff]
          %v379 = vld [vmem:[%s374 + $0x20] sm:$0xff]
          %v380 = vld [vmem:[%s374 + $0x28] sm:$0xff]
          %v381 = vld [vmem:[%s374 + $0x30] sm:$0xff]
          %v382 = vld [vmem:[%s374 + $0x38] sm:$0xff]
          %v383 = vld [vmem:[%s374 + $0x40] sm:$0xff]
          %v384 = vld [vmem:[%s374 + $0x48] sm:$0xff]
          %v385 = vld [vmem:[%s374 + $0x50] sm:$0xff]
          %v386 = vld [vmem:[%s374 + $0x58] sm:$0xff]
          %v387 = vld [vmem:[%s374 + $0x60] sm:$0xff]
          %v388 = vld [vmem:[%s374 + $0x68] sm:$0xff]
          %v389 = vld [vmem:[%s374 + $0x70] sm:$0xff]
          %v390 = vld [vmem:[%s374 + $0x78] sm:$0xff]
          %391 = vmatpush.msra.mxu0 %v390
          %392 = vmatpush.msra.mxu0 %v389
          %393 = vmatpush.msra.mxu0 %v388
          %394 = vmatpush.msra.mxu0 %v387
          %395 = vmatpush.msra.mxu0 %v386
          %396 = vmatpush.msra.mxu0 %v385
          %397 = vmatpush.msra.mxu0 %v384
          %398 = vmatpush.msra.mxu0 %v383
          %399 = vmatpush.msra.mxu0 %v382
          %400 = vmatpush.msra.mxu0 %v381
          %401 = vmatpush.msra.mxu0 %v380
          %402 = vmatpush.msra.mxu0 %v379
          %403 = vmatpush.msra.mxu0 %v378
          %404 = vmatpush.msra.mxu0 %v377
          %405 = vmatpush.msra.mxu0 %v376
          %406 = vmatpush.msra.mxu0 %v375
          %407 = vmatmul.f32.gmra.mxu0 %v371
          %v408 = vpop.f32.mrf.mxu0
          %v409 = vadd.f32 0.0, %v408
          %410 = vmatmul.f32.gmra.mxu0 %v372
          %v411 = vpop.f32.mrf.mxu0
          %v412 = vadd.f32 0.0, %v411
          %413 = vdwg.mxu0
          %v414 = vadd.f32 %v369, %v409
          %v415 = vadd.f32 %v369, %v412
          %v416 = vld [vmem:[%s362 + $0x1] sm:$0xff]
          %v417 = vld [vmem:[%s362 + $0x9] sm:$0xff]
          %s418 = sadd.s32 128, %s373
          %s419 = scalar_lea.vmem [#allocation3], %s418
          %v420 = vld [vmem:[%s419] sm:$0xff]
          %v421 = vld [vmem:[%s419 + $0x8] sm:$0xff]
          %v422 = vld [vmem:[%s419 + $0x10] sm:$0xff]
          %v423 = vld [vmem:[%s419 + $0x18] sm:$0xff]
          %v424 = vld [vmem:[%s419 + $0x20] sm:$0xff]
          %v425 = vld [vmem:[%s419 + $0x28] sm:$0xff]
          %v426 = vld [vmem:[%s419 + $0x30] sm:$0xff]
          %v427 = vld [vmem:[%s419 + $0x38] sm:$0xff]
          %v428 = vld [vmem:[%s419 + $0x40] sm:$0xff]
          %v429 = vld [vmem:[%s419 + $0x48] sm:$0xff]
          %v430 = vld [vmem:[%s419 + $0x50] sm:$0xff]
          %v431 = vld [vmem:[%s419 + $0x58] sm:$0xff]
          %v432 = vld [vmem:[%s419 + $0x60] sm:$0xff]
          %v433 = vld [vmem:[%s419 + $0x68] sm:$0xff]
          %v434 = vld [vmem:[%s419 + $0x70] sm:$0xff]
          %v435 = vld [vmem:[%s419 + $0x78] sm:$0xff]
          %436 = vmatpush.msra.mxu0 %v435
          %437 = vmatpush.msra.mxu0 %v434
          %438 = vmatpush.msra.mxu0 %v433
          %439 = vmatpush.msra.mxu0 %v432
          %440 = vmatpush.msra.mxu0 %v431
          %441 = vmatpush.msra.mxu0 %v430
          %442 = vmatpush.msra.mxu0 %v429
          %443 = vmatpush.msra.mxu0 %v428
          %444 = vmatpush.msra.mxu0 %v427
          %445 = vmatpush.msra.mxu0 %v426
          %446 = vmatpush.msra.mxu0 %v425
          %447 = vmatpush.msra.mxu0 %v424
          %448 = vmatpush.msra.mxu0 %v423
          %449 = vmatpush.msra.mxu0 %v422
          %450 = vmatpush.msra.mxu0 %v421
          %451 = vmatpush.msra.mxu0 %v420
          %452 = vmatmul.f32.gmra.mxu0 %v416
          %v453 = vpop.f32.mrf.mxu0
          %v454 = vadd.f32 0.0, %v453
          %455 = vmatmul.f32.gmra.mxu0 %v417
          %v456 = vpop.f32.mrf.mxu0
          %v457 = vadd.f32 0.0, %v456
          %458 = vdwg.mxu0
          %v459 = vadd.f32 %v414, %v454
          %v460 = vadd.f32 %v415, %v457
          %v461 = vld [vmem:[%s362 + $0x2] sm:$0xff]
          %v462 = vld [vmem:[%s362 + $0xa] sm:$0xff]
          %s463 = sadd.s32 256, %s373
          %s464 = scalar_lea.vmem [#allocation3], %s463
          %v465 = vld [vmem:[%s464] sm:$0xff]
          %v466 = vld [vmem:[%s464 + $0x8] sm:$0xff]
          %v467 = vld [vmem:[%s464 + $0x10] sm:$0xff]
          %v468 = vld [vmem:[%s464 + $0x18] sm:$0xff]
          %v469 = vld [vmem:[%s464 + $0x20] sm:$0xff]
          %v470 = vld [vmem:[%s464 + $0x28] sm:$0xff]
          %v471 = vld [vmem:[%s464 + $0x30] sm:$0xff]
          %v472 = vld [vmem:[%s464 + $0x38] sm:$0xff]
          %v473 = vld [vmem:[%s464 + $0x40] sm:$0xff]
          %v474 = vld [vmem:[%s464 + $0x48] sm:$0xff]
          %v475 = vld [vmem:[%s464 + $0x50] sm:$0xff]
          %v476 = vld [vmem:[%s464 + $0x58] sm:$0xff]
          %v477 = vld [vmem:[%s464 + $0x60] sm:$0xff]
          %v478 = vld [vmem:[%s464 + $0x68] sm:$0xff]
          %v479 = vld [vmem:[%s464 + $0x70] sm:$0xff]
          %v480 = vld [vmem:[%s464 + $0x78] sm:$0xff]
          %481 = vmatpush.msra.mxu0 %v480
          %482 = vmatpush.msra.mxu0 %v479
          %483 = vmatpush.msra.mxu0 %v478
          %484 = vmatpush.msra.mxu0 %v477
          %485 = vmatpush.msra.mxu0 %v476
          %486 = vmatpush.msra.mxu0 %v475
          %487 = vmatpush.msra.mxu0 %v474
          %488 = vmatpush.msra.mxu0 %v473
          %489 = vmatpush.msra.mxu0 %v472
          %490 = vmatpush.msra.mxu0 %v471
          %491 = vmatpush.msra.mxu0 %v470
          %492 = vmatpush.msra.mxu0 %v469
          %493 = vmatpush.msra.mxu0 %v468
          %494 = vmatpush.msra.mxu0 %v467
          %495 = vmatpush.msra.mxu0 %v466
          %496 = vmatpush.msra.mxu0 %v465
          %497 = vmatmul.f32.gmra.mxu0 %v461
          %v498 = vpop.f32.mrf.mxu0
          %v499 = vadd.f32 0.0, %v498
          %500 = vmatmul.f32.gmra.mxu0 %v462
          %v501 = vpop.f32.mrf.mxu0
          %v502 = vadd.f32 0.0, %v501
          %503 = vdwg.mxu0
          %v504 = vadd.f32 %v459, %v499
          %v505 = vadd.f32 %v460, %v502
          %v506 = vmax.f32 %v504, 0.0
          %v507 = vmax.f32 %v505, 0.0
          %508 = vst [vmem:[#allocation2 + $0x1] sm:$0xff] %v506
          %509 = vst [vmem:[#allocation2 + $0x9] sm:$0xff] %v507
        $region45: #{convnet_forward_nchw.1} parent=31 // loop_footer
          %s218 = sadd.s32 1, %s214
        $region46: #{convnet_forward_nchw.1} parent=31 // loop_footer_branch
          %213 = sbr.rel target = $region42
        $region47: #{convnet_forward_nchw.1} parent=31 // loop_exit
          _
        %v510 = vld [vmem:[#allocation2 + $0x1] sm:$0xff]
        %v511 = vld [vmem:[#allocation2 + $0x9] sm:$0xff]
        %512 = vst [vmem:[%s204] sm:$0xff] %v510
        %513 = vst [vmem:[%s204 + $0x8] sm:$0xff] %v511
        %p514 = scmp.lt.s32.totalorder %s16, 1
        %s515 = scalar_select %p514, %s16, 1
        %s516 = smul.addr %s515, 2
        %s517 = smul.addr %s516, 8
        %s518 = scalar_lea.vmem %s3, %s517
        // Predicated region
        $region48: #{convnet_forward_nchw.1} parent=31 // pred_check
          %p519 = pneg %p102
        $region49: #{convnet_forward_nchw.1} parent=31 // pred_check_branch
          %521 = sbr.rel (%p519) target = $region51
        $region50: #{convnet_forward_nchw.1} parent=31 // pred_region
          _
        $region51: #{convnet_forward_nchw.1} parent=31 // pred_fallthru
          _
      $region32: #{convnet_forward_nchw.1} parent=5 // pred_fallthru
        _
      %p522 = scmp.le.s32.totalorder 2, %s11
      // Predicated region
      $region52: #{convnet_forward_nchw.1} parent=5 // pred_check
        %p523 = pneg %p522
      $region53: #{convnet_forward_nchw.1} parent=5 // pred_check_branch
        %525 = sbr.rel (%p523) target = $region55
      $region54: #{convnet_forward_nchw.1} parent=5 // pred_region
        %s526 = ssub.s32 %s11, 2
        // Predicated region
        $region56: #{convnet_forward_nchw.1} parent=54 // pred_check
          %p527 = pneg %p108
        $region57: #{convnet_forward_nchw.1} parent=54 // pred_check_branch
          %529 = sbr.rel (%p527) target = $region59
        $region58: #{convnet_forward_nchw.1} parent=54 // pred_region
          %p530 = scmp.lt.s32.totalorder %s17, 1
          %s531 = scalar_select %p530, %s17, 1
          %s532 = smul.addr %s531, 2
          %s533 = smul.addr %s532, 8
          %s534 = scalar_lea.vmem %s3, %s533
        $region59: #{convnet_forward_nchw.1} parent=54 // pred_fallthru
          _
      $region55: #{convnet_forward_nchw.1} parent=5 // pred_fallthru
        _
    $region6: #{convnet_forward_nchw.1} parent=1 // loop_footer
      %s15 = sadd.s32 1, %s11
    $region7: #{convnet_forward_nchw.1} parent=1 // loop_footer_branch
      %10 = sbr.rel target = $region3
    $region8: #{convnet_forward_nchw.1} parent=1 // loop_exit
      _
    %535 = vsyncpa [#allocation4], 1
    %s536 = scalar_lea.sflag [#allocation4], 1
    %537 = vsyncpa %s536, 1
    %538 = vsyncpa [#allocation6], 1

</llo_original>
